<compile_context>
chip_gen: v7x
topology: tpu7x:2x2x1
jax: 0.10.0
libtpu: 0.0.40
codegen_flags: <defaults>
</compile_context>

<pallas_src>
import functools

import jax
import jax.numpy as jnp
from jax.experimental import pallas as pl
from jax.experimental.pallas import tpu as pltpu

_LANE = 128


def _round_up(x, m):
    return (x + m - 1) // m * m


def _studnet_kernel(x_ref, w1_ref, b1_ref, w2_ref, b2_ref, fs_ref, logit_ref,
                    *, matmul_dtype):
    x = x_ref[...]
    if matmul_dtype is not None:
        x = x.astype(matmul_dtype)

    # Linear 1: MXU matmul with f32 accumulation, bias add in f32 on the VPU.
    fs = jnp.dot(x, w1_ref[...], preferred_element_type=jnp.float32)
    fs = fs + b1_ref[...].astype(jnp.float32)
    fs_out = fs.astype(fs_ref.dtype)
    fs_ref[...] = fs_out  # lane-dense (padded to 128) store

    # Linear 2: feed the *stored/rounded* fs (PyTorch computes logits from the
    # already-rounded activation), bias add in f32.
    lhs2 = fs_out.astype(matmul_dtype) if matmul_dtype is not None else fs_out
    logit = jnp.dot(lhs2, w2_ref[...], preferred_element_type=jnp.float32)
    logit = logit + b2_ref[...].astype(jnp.float32)
    logit_ref[...] = logit.astype(logit_ref.dtype)  # lane-dense store


def studnet_forward(x, w1, b1, w2, b2, *, block_rows=512, matmul_dtype=None):
    """x: [B, f_dim]; w1: [f_dim, feature_dim]; b1: [feature_dim] or [1, feature_dim];
    w2: [feature_dim, n_cls]; b2: [n_cls] or [1, n_cls]. Returns (fs, logit).

    block_rows: batch-tile rows (amortizes per-grid-step overhead; sized to fit
    VMEM even on v7x's 64 MiB at these feature widths).
    matmul_dtype: e.g. jnp.bfloat16 to route the MXU through bf16 (f32 accum).
    """
    B, f_dim = x.shape
    feature_dim = w1.shape[1]
    n_cls = w2.shape[1]
    assert w1.shape[0] == f_dim
    assert w2.shape[0] == feature_dim

    fd_pad = _round_up(feature_dim, _LANE)
    nc_pad = _round_up(n_cls, _LANE)

    # Zero-pad weight/bias output dims so both kernel outputs are lane-dense.
    w1p = jnp.pad(w1, ((0, 0), (0, fd_pad - feature_dim)))
    b1p = jnp.pad(b1.reshape(1, -1), ((0, 0), (0, fd_pad - feature_dim)))
    w2p = jnp.pad(w2, ((0, fd_pad - feature_dim), (0, nc_pad - n_cls)))
    b2p = jnp.pad(b2.reshape(1, -1), ((0, 0), (0, nc_pad - n_cls)))
    if matmul_dtype is not None:
        w1p = w1p.astype(matmul_dtype)
        w2p = w2p.astype(matmul_dtype)

    # Batch tiling: large row tiles, padded so every grid step is a full block.
    tm = min(block_rows, _round_up(B, 8))
    b_pad = _round_up(B, tm)
    xp = jnp.pad(x, ((0, b_pad - B), (0, 0))) if b_pad != B else x
    grid = (b_pad // tm,)

    itemsize = x.dtype.itemsize
    flops = 2 * b_pad * (f_dim * fd_pad + fd_pad * nc_pad)
    bytes_accessed = (
        xp.size * itemsize
        + w1p.size * w1p.dtype.itemsize + b1p.size * b1p.dtype.itemsize
        + w2p.size * w2p.dtype.itemsize + b2p.size * b2p.dtype.itemsize
        + b_pad * (fd_pad + nc_pad) * itemsize
    )

    # VMEM estimate: double-buffered activation blocks + resident (but possibly
    # double-buffered) weights. Only raise the scoped limit when needed; cap
    # below v7x's 64 MiB physical VMEM.
    est_vmem = (2 * tm * (f_dim + fd_pad + nc_pad) * 4
                + 2 * (w1p.size + w2p.size + b1p.size + b2p.size) * 4)
    cp_kwargs = dict(dimension_semantics=("parallel",))
    if est_vmem > (32 << 20):
        cp_kwargs["vmem_limit_bytes"] = int(min(est_vmem + (4 << 20), 56 << 20))
    compiler_params = pltpu.CompilerParams(**cp_kwargs)

    kernel = functools.partial(_studnet_kernel, matmul_dtype=matmul_dtype)

    fs_p, logit_p = pl.pallas_call(
        kernel,
        out_shape=(
            jax.ShapeDtypeStruct((b_pad, fd_pad), x.dtype),
            jax.ShapeDtypeStruct((b_pad, nc_pad), x.dtype),
        ),
        grid=grid,
        in_specs=[
            pl.BlockSpec((tm, f_dim), lambda i: (i, 0)),      # x: streamed
            pl.BlockSpec((f_dim, fd_pad), lambda i: (0, 0)),  # W1: resident
            pl.BlockSpec((1, fd_pad), lambda i: (0, 0)),      # b1: resident
            pl.BlockSpec((fd_pad, nc_pad), lambda i: (0, 0)), # W2: resident
            pl.BlockSpec((1, nc_pad), lambda i: (0, 0)),      # b2: resident
        ],
        out_specs=(
            pl.BlockSpec((tm, fd_pad), lambda i: (i, 0)),
            pl.BlockSpec((tm, nc_pad), lambda i: (i, 0)),
        ),
        compiler_params=compiler_params,
        cost_estimate=pl.CostEstimate(
            flops=flops, transcendentals=0, bytes_accessed=bytes_accessed),
    )(xp, w1p, b1p, w2p, b2p)

    # Slice off batch padding and lane padding (wrapper-side plumbing).
    return fs_p[:B, :feature_dim], logit_p[:B, :n_cls]


def init_params(key, f_dim, feature_dim, n_cls=100, dtype=jnp.float32):
    """Deterministic init mimicking nn.Linear's uniform(-1/sqrt(in), 1/sqrt(in)).
    Weights stored as [in, out] (transposed vs PyTorch's [out, in])."""
    k1, k2, k3, k4 = jax.random.split(key, 4)
    lim1 = 1.0 / (f_dim ** 0.5)
    lim2 = 1.0 / (feature_dim ** 0.5)
    w1 = jax.random.uniform(k1, (f_dim, feature_dim), dtype, -lim1, lim1)
    b1 = jax.random.uniform(k2, (1, feature_dim), dtype, -lim1, lim1)
    w2 = jax.random.uniform(k3, (feature_dim, n_cls), dtype, -lim2, lim2)
    b2 = jax.random.uniform(k4, (1, n_cls), dtype, -lim2, lim2)
    return w1, b1, w2, b2


if __name__ == "__main__":
    key = jax.random.PRNGKey(0)
    B, f_dim, feature_dim, n_cls = 8, 32, 64, 100

    kx, kp = jax.random.split(key)
    x = jax.random.normal(kx, (B, f_dim), jnp.float32)
    w1, b1, w2, b2 = init_params(kp, f_dim, feature_dim, n_cls)

    fwd = jax.jit(studnet_forward)
    fs, logit = fwd(x, w1, b1, w2, b2)
    jax.block_until_ready((fs, logit))

    # Reference check in plain JAX.
    fs_ref = x @ w1 + b1
    logit_ref = fs_ref @ w2 + b2
    assert fs.shape == (B, feature_dim) and logit.shape == (B, n_cls)
    assert jnp.allclose(fs, fs_ref, atol=1e-5, rtol=1e-5)
    assert jnp.allclose(logit, logit_ref, atol=1e-5, rtol=1e-5)

    print("KERNEL_OK")
</pallas_src>

<mosaic_0001>
module attributes {stable_mosaic.version = 11 : i64} {
  func.func @_studnet_kernel(%arg0: i32, %arg1: memref<8x32xf32, #tpu.memory_space<vmem>>, %arg2: memref<32x128xf32, #tpu.memory_space<vmem>>, %arg3: memref<1x128xf32, #tpu.memory_space<vmem>>, %arg4: memref<128x128xf32, #tpu.memory_space<vmem>>, %arg5: memref<1x128xf32, #tpu.memory_space<vmem>>, %arg6: memref<8x128xf32, #tpu.memory_space<vmem>>, %arg7: memref<8x128xf32, #tpu.memory_space<vmem>>) attributes {dimension_semantics = [#tpu.dimension_semantics<parallel>], iteration_bounds = array<i64: 1>, scalar_prefetch = 0 : i64, scratch_operands = 0 : i64, tpu.core_type = #tpu.core_type<tc>, window_params = [{transform_indices = @transform_0, window_bounds = array<i64: 8, 32>}, {pipeline_mode = #tpu.pipeline_mode<synchronous>, transform_indices = @transform_1, window_bounds = array<i64: 32, 128>}, {pipeline_mode = #tpu.pipeline_mode<synchronous>, transform_indices = @transform_2, window_bounds = array<i64: 1, 128>}, {pipeline_mode = #tpu.pipeline_mode<synchronous>, transform_indices = @transform_3, window_bounds = array<i64: 128, 128>}, {pipeline_mode = #tpu.pipeline_mode<synchronous>, transform_indices = @transform_4, window_bounds = array<i64: 1, 128>}, {transform_indices = @transform_5, window_bounds = array<i64: 8, 128>}, {transform_indices = @transform_6, window_bounds = array<i64: 8, 128>}]} {
    %c0 = arith.constant 0 : index
    %c0_0 = arith.constant 0 : index
    %0 = vector.load %arg1[%c0, %c0_0] : memref<8x32xf32, #tpu.memory_space<vmem>>, vector<8x32xf32>
    %c0_1 = arith.constant 0 : index
    %c0_2 = arith.constant 0 : index
    %1 = vector.load %arg2[%c0_1, %c0_2] : memref<32x128xf32, #tpu.memory_space<vmem>>, vector<32x128xf32>
    %cst = arith.constant dense<0.000000e+00> : vector<8x128xf32>
    %2 = tpu.matmul %0, %1, %cst {dimension_numbers = #tpu.dot_dimension_numbers<[1], [0], [0], [1], [0, 0, 1, 1], [], []>} : vector<8x32xf32>, vector<32x128xf32>, vector<8x128xf32> -> vector<8x128xf32>
    %c0_3 = arith.constant 0 : index
    %c0_4 = arith.constant 0 : index
    %3 = vector.load %arg3[%c0_3, %c0_4] : memref<1x128xf32, #tpu.memory_space<vmem>>, vector<1x128xf32>
    %4 = vector.broadcast %3 : vector<1x128xf32> to vector<8x128xf32>
    %5 = arith.addf %2, %4 : vector<8x128xf32>
    %c0_5 = arith.constant 0 : index
    %c0_6 = arith.constant 0 : index
    %6 = vector.load %arg6[%c0_5, %c0_6] : memref<8x128xf32, #tpu.memory_space<vmem>>, vector<8x128xf32>
    tpu.vector_store %arg6[%c0_5, %c0_6], %5 {strides = array<i32>} : memref<8x128xf32, #tpu.memory_space<vmem>>, vector<8x128xf32>,
    %c0_7 = arith.constant 0 : index
    %c0_8 = arith.constant 0 : index
    %7 = vector.load %arg4[%c0_7, %c0_8] : memref<128x128xf32, #tpu.memory_space<vmem>>, vector<128x128xf32>
    %cst_9 = arith.constant dense<0.000000e+00> : vector<8x128xf32>
    %8 = tpu.matmul %5, %7, %cst_9 {dimension_numbers = #tpu.dot_dimension_numbers<[1], [0], [0], [1], [0, 0, 1, 1], [], []>} : vector<8x128xf32>, vector<128x128xf32>, vector<8x128xf32> -> vector<8x128xf32>
    %c0_10 = arith.constant 0 : index
    %c0_11 = arith.constant 0 : index
    %9 = vector.load %arg5[%c0_10, %c0_11] : memref<1x128xf32, #tpu.memory_space<vmem>>, vector<1x128xf32>
    %10 = vector.broadcast %9 : vector<1x128xf32> to vector<8x128xf32>
    %11 = arith.addf %8, %10 : vector<8x128xf32>
    %c0_12 = arith.constant 0 : index
    %c0_13 = arith.constant 0 : index
    %12 = vector.load %arg7[%c0_12, %c0_13] : memref<8x128xf32, #tpu.memory_space<vmem>>, vector<8x128xf32>
    tpu.vector_store %arg7[%c0_12, %c0_13], %11 {strides = array<i32>} : memref<8x128xf32, #tpu.memory_space<vmem>>, vector<8x128xf32>,
    return
  }
  func.func @transform_0(%arg0: i32) -> (i32, i32) {
    %c0_i32 = arith.constant 0 : i32
    %c0_i32_0 = arith.constant 0 : i32
    return %arg0, %c0_i32 : i32, i32
  }
  func.func @transform_1(%arg0: i32) -> (i32, i32) {
    %c0_i32 = arith.constant 0 : i32
    %c0_i32_0 = arith.constant 0 : i32
    %c0_i32_1 = arith.constant 0 : i32
    return %c0_i32, %c0_i32_0 : i32, i32
  }
  func.func @transform_2(%arg0: i32) -> (i32, i32) {
    %c0_i32 = arith.constant 0 : i32
    %c0_i32_0 = arith.constant 0 : i32
    %c0_i32_1 = arith.constant 0 : i32
    return %c0_i32, %c0_i32_0 : i32, i32
  }
  func.func @transform_3(%arg0: i32) -> (i32, i32) {
    %c0_i32 = arith.constant 0 : i32
    %c0_i32_0 = arith.constant 0 : i32
    %c0_i32_1 = arith.constant 0 : i32
    return %c0_i32, %c0_i32_0 : i32, i32
  }
  func.func @transform_4(%arg0: i32) -> (i32, i32) {
    %c0_i32 = arith.constant 0 : i32
    %c0_i32_0 = arith.constant 0 : i32
    %c0_i32_1 = arith.constant 0 : i32
    return %c0_i32, %c0_i32_0 : i32, i32
  }
  func.func @transform_5(%arg0: i32) -> (i32, i32) {
    %c0_i32 = arith.constant 0 : i32
    %c0_i32_0 = arith.constant 0 : i32
    return %arg0, %c0_i32 : i32, i32
  }
  func.func @transform_6(%arg0: i32) -> (i32, i32) {
    %c0_i32 = arith.constant 0 : i32
    %c0_i32_0 = arith.constant 0 : i32
    return %arg0, %c0_i32 : i32, i32
  }
}

</mosaic_0001>

<llo_original>
// kernel: studnet_forward.1
$region0: #{studnet_forward.1}
  #allocation0 [shape = 'u32[]', space=smem, size = 0x4, offset = 0x4, fixed_abs, tag = 'smem constant byte address 0x4 - core index']
  #allocation1 [shape = 'u32[144,128]{1,0:T(1,128)}', space=vmem, size = 0x12000, scoped, tag = 'internal scratch']
  %s0 = inlined_call_operand.vmem [shape: f32[8,32], index: 0, kind: input, shape index: {}]
  %s1 = inlined_call_operand.vmem [shape: f32[32,128], index: 1, kind: input, shape index: {}]
  %s2 = inlined_call_operand.vmem [shape: f32[1,128], index: 2, kind: input, shape index: {}]
  %s3 = inlined_call_operand.vmem [shape: f32[128,128], index: 3, kind: input, shape index: {}]
  %s4 = inlined_call_operand.vmem [shape: f32[1,128], index: 4, kind: input, shape index: {}]
  %s5 = inlined_call_operand.hbm [shape: f32[8,128], index: 5, kind: output, shape index: {0}]
  %s6 = inlined_call_operand.hbm [shape: f32[8,128], index: 6, kind: output, shape index: {1}]
  %7 = xla_tuple %s5, %s6
  %s8 = sld [smem:[#allocation0]]
  $region38: #{studnet_forward.1} parent=0
    _
  %s10 = ssub.s32 1, %s8
  %s11 = scalar_select 0, %s10, %s8
  $region1: #{studnet_forward.1} parent=0
    #allocation2 [shape = 'u8[4096]{0}', space=vmem, size = 0x1000, scoped, tag = 'output window, operand 0, single buffered']
    #allocation3 [shape = 's32[1]{0}', space=sflag, size = 0x4, scoped, tag = 'scoped memory for studnet_forward.1']
    #allocation4 [shape = 'u8[4096]{0}', space=vmem, size = 0x1000, scoped, tag = 'output window, operand 1, single buffered']
    #allocation5 [shape = 's32[1]{0}', space=sflag, size = 0x4, scoped, tag = 'scoped memory for studnet_forward.1']
    %12 = vsyncpa [#allocation3], 0
    %13 = vsyncpa [#allocation5], 0
    // Predicated region
    $region2: #{studnet_forward.1} parent=1 // pred_check
      _
    $region3: #{studnet_forward.1} parent=1 // pred_check_branch
      %15 = sbr.rel (0) target = $region5
    $region4: #{studnet_forward.1} parent=1 // pred_region
      _
    $region5: #{studnet_forward.1} parent=1 // pred_fallthru
      _
    // Predicated region
    $region6: #{studnet_forward.1} parent=1 // pred_check
      _
    $region7: #{studnet_forward.1} parent=1 // pred_check_branch
      %17 = sbr.rel (0) target = $region9
    $region8: #{studnet_forward.1} parent=1 // pred_region
      _
    $region9: #{studnet_forward.1} parent=1 // pred_fallthru
      _
    // Predicated region
    $region10: #{studnet_forward.1} parent=1 // pred_check
      _
    $region11: #{studnet_forward.1} parent=1 // pred_check_branch
      %19 = sbr.rel (0) target = $region13
    $region12: #{studnet_forward.1} parent=1 // pred_region
      _
    $region13: #{studnet_forward.1} parent=1 // pred_fallthru
      _
    // Predicated region
    $region14: #{studnet_forward.1} parent=1 // pred_check
      _
    $region15: #{studnet_forward.1} parent=1 // pred_check_branch
      %21 = sbr.rel (0) target = $region17
    $region16: #{studnet_forward.1} parent=1 // pred_region
      _
    $region17: #{studnet_forward.1} parent=1 // pred_fallthru
      _
    // Predicated region
    $region18: #{studnet_forward.1} parent=1 // pred_check
      _
    $region19: #{studnet_forward.1} parent=1 // pred_check_branch
      %23 = sbr.rel (0) target = $region21
    $region20: #{studnet_forward.1} parent=1 // pred_region
      _
    $region21: #{studnet_forward.1} parent=1 // pred_fallthru
      _
    %v24 = vld [vmem:[%s0] sm:$0xff]
    %v25 = vld [vmem:[%s1] sm:$0xff]
    %v26 = vld [vmem:[%s1 + $0x8] sm:$0xff]
    %v27 = vld [vmem:[%s1 + $0x10] sm:$0xff]
    %v28 = vld [vmem:[%s1 + $0x18] sm:$0xff]
    %v29 = vld [vmem:[%s2] sm:$0x1]
    %v31 = vlaneseq
    %v32 = vshrl.u32 %v31, 7
    %v33 = vsub.s32 0, %v32
    %v34 = vrot.slane %v29, %v33
    %vm36 = vcmask 261120
    %v38 = vsel %vm36, %v24, 0
    %40 = vmatprep.subr.mxu0 0.0
    %41 = vmatpush1.msra.mxu0 %v25
    %42 = vmatprep.subr.mxu0 0.0
    %43 = vmatpush1.msra.mxu0 %v26
    %44 = vmatprep.subr.mxu0 0.0
    %45 = vmatpush1.msra.mxu0 %v27
    %46 = vmatprep.subr.mxu0 0.0
    %47 = vmatpush1.msra.mxu0 %v28
    %48 = vmatprep.subr.mxu0 0.0
    %49 = vmatpush1.msra.mxu0 0.0
    %50 = vmatprep.subr.mxu0 0.0
    %51 = vmatpush1.msra.mxu0 0.0
    %52 = vmatprep.subr.mxu0 0.0
    %53 = vmatpush1.msra.mxu0 0.0
    %54 = vmatprep.subr.mxu0 0.0
    %55 = vmatpush1.msra.mxu0 0.0
    %56 = vmatprep.subr.mxu0 0.0
    %57 = vmatpush1.msra.mxu0 0.0
    %58 = vmatprep.subr.mxu0 0.0
    %59 = vmatpush1.msra.mxu0 0.0
    %60 = vmatprep.subr.mxu0 0.0
    %61 = vmatpush1.msra.mxu0 0.0
    %62 = vmatprep.subr.mxu0 0.0
    %63 = vmatpush1.msra.mxu0 0.0
    %64 = vmatprep.subr.mxu0 0.0
    %65 = vmatpush1.msra.mxu0 0.0
    %66 = vmatprep.subr.mxu0 0.0
    %67 = vmatpush1.msra.mxu0 0.0
    %68 = vmatprep.subr.mxu0 0.0
    %69 = vmatpush1.msra.mxu0 0.0
    %70 = vmatprep.subr.mxu0 0.0
    %71 = vmatpush1.msra.mxu0 0.0
    %72 = vmatprep.subr.mxu0 0.0
    %73 = vmatpush1.msra.mxu0 0.0
    %74 = vmatprep.subr.mxu0 0.0
    %75 = vmatpush1.msra.mxu0 0.0
    %76 = vmatprep.subr.mxu0 0.0
    %77 = vmatpush1.msra.mxu0 0.0
    %78 = vmatprep.subr.mxu0 0.0
    %79 = vmatpush1.msra.mxu0 0.0
    %80 = vmatprep.subr.mxu0 0.0
    %81 = vmatpush1.msra.mxu0 0.0
    %82 = vmatprep.subr.mxu0 0.0
    %83 = vmatpush1.msra.mxu0 0.0
    %84 = vmatprep.subr.mxu0 0.0
    %85 = vmatpush1.msra.mxu0 0.0
    %86 = vmatprep.subr.mxu0 0.0
    %87 = vmatpush1.msra.mxu0 0.0
    %88 = vmatprep.subr.mxu0 0.0
    %89 = vmatpush1.msra.mxu0 0.0
    %90 = vmatprep.subr.mxu0 0.0
    %91 = vmatpush1.msra.mxu0 0.0
    %92 = vmatprep.subr.mxu0 0.0
    %93 = vmatpush1.msra.mxu0 0.0
    %94 = vmatprep.subr.mxu0 0.0
    %95 = vmatpush1.msra.mxu0 0.0
    %96 = vmatprep.subr.mxu0 0.0
    %97 = vmatpush1.msra.mxu0 0.0
    %98 = vmatprep.subr.mxu0 0.0
    %99 = vmatpush1.msra.mxu0 0.0
    %100 = vmatprep.subr.mxu0 0.0
    %101 = vmatpush1.msra.mxu0 0.0
    %102 = vmatprep.subr.mxu0 0.0
    %103 = vmatpush1.msra.mxu0 0.0
    %104 = vmatprep.mubr.f32.mxu0 0.0
    %105 = vmatmul.mubr.f32.gmra.mrb[0].mxu0 %v38
    %v106 = vpop.f32.mrb[0].mxu0
    %v107 = vadd.f32 %v34, %v106
    %v108 = vpop.f32.mrb[0].mxu0
    %109 = vdwg.mxu0
    %110 = vst [vmem:[#allocation2] sm:$0xff] %v107
    %v111 = vld [vmem:[%s3] sm:$0xff]
    %v112 = vld [vmem:[%s3 + $0x8] sm:$0xff]
    %v113 = vld [vmem:[%s3 + $0x10] sm:$0xff]
    %v114 = vld [vmem:[%s3 + $0x18] sm:$0xff]
    %v115 = vld [vmem:[%s3 + $0x20] sm:$0xff]
    %v116 = vld [vmem:[%s3 + $0x28] sm:$0xff]
    %v117 = vld [vmem:[%s3 + $0x30] sm:$0xff]
    %v118 = vld [vmem:[%s3 + $0x38] sm:$0xff]
    %v119 = vld [vmem:[%s3 + $0x40] sm:$0xff]
    %v120 = vld [vmem:[%s3 + $0x48] sm:$0xff]
    %v121 = vld [vmem:[%s3 + $0x50] sm:$0xff]
    %v122 = vld [vmem:[%s3 + $0x58] sm:$0xff]
    %v123 = vld [vmem:[%s3 + $0x60] sm:$0xff]
    %v124 = vld [vmem:[%s3 + $0x68] sm:$0xff]
    %v125 = vld [vmem:[%s3 + $0x70] sm:$0xff]
    %v126 = vld [vmem:[%s3 + $0x78] sm:$0xff]
    %v127 = vld [vmem:[%s4] sm:$0x1]
    %v129 = vlaneseq
    %v130 = vshrl.u32 %v129, 7
    %v131 = vsub.s32 0, %v130
    %v132 = vrot.slane %v127, %v131
    %134 = vmatprep.subr.mxu0 0.0
    %135 = vmatpush1.msra.mxu0 %v111
    %136 = vmatprep.subr.mxu0 0.0
    %137 = vmatpush1.msra.mxu0 %v112
    %138 = vmatprep.subr.mxu0 0.0
    %139 = vmatpush1.msra.mxu0 %v113
    %140 = vmatprep.subr.mxu0 0.0
    %141 = vmatpush1.msra.mxu0 %v114
    %142 = vmatprep.subr.mxu0 0.0
    %143 = vmatpush1.msra.mxu0 %v115
    %144 = vmatprep.subr.mxu0 0.0
    %145 = vmatpush1.msra.mxu0 %v116
    %146 = vmatprep.subr.mxu0 0.0
    %147 = vmatpush1.msra.mxu0 %v117
    %148 = vmatprep.subr.mxu0 0.0
    %149 = vmatpush1.msra.mxu0 %v118
    %150 = vmatprep.subr.mxu0 0.0
    %151 = vmatpush1.msra.mxu0 %v119
    %152 = vmatprep.subr.mxu0 0.0
    %153 = vmatpush1.msra.mxu0 %v120
    %154 = vmatprep.subr.mxu0 0.0
    %155 = vmatpush1.msra.mxu0 %v121
    %156 = vmatprep.subr.mxu0 0.0
    %157 = vmatpush1.msra.mxu0 %v122
    %158 = vmatprep.subr.mxu0 0.0
    %159 = vmatpush1.msra.mxu0 %v123
    %160 = vmatprep.subr.mxu0 0.0
    %161 = vmatpush1.msra.mxu0 %v124
    %162 = vmatprep.subr.mxu0 0.0
    %163 = vmatpush1.msra.mxu0 %v125
    %164 = vmatprep.subr.mxu0 0.0
    %165 = vmatpush1.msra.mxu0 %v126
    %166 = vmatprep.subr.mxu0 0.0
    %167 = vmatpush1.msra.mxu0 0.0
    %168 = vmatprep.subr.mxu0 0.0
    %169 = vmatpush1.msra.mxu0 0.0
    %170 = vmatprep.subr.mxu0 0.0
    %171 = vmatpush1.msra.mxu0 0.0
    %172 = vmatprep.subr.mxu0 0.0
    %173 = vmatpush1.msra.mxu0 0.0
    %174 = vmatprep.subr.mxu0 0.0
    %175 = vmatpush1.msra.mxu0 0.0
    %176 = vmatprep.subr.mxu0 0.0
    %177 = vmatpush1.msra.mxu0 0.0
    %178 = vmatprep.subr.mxu0 0.0
    %179 = vmatpush1.msra.mxu0 0.0
    %180 = vmatprep.subr.mxu0 0.0
    %181 = vmatpush1.msra.mxu0 0.0
    %182 = vmatprep.subr.mxu0 0.0
    %183 = vmatpush1.msra.mxu0 0.0
    %184 = vmatprep.subr.mxu0 0.0
    %185 = vmatpush1.msra.mxu0 0.0
    %186 = vmatprep.subr.mxu0 0.0
    %187 = vmatpush1.msra.mxu0 0.0
    %188 = vmatprep.subr.mxu0 0.0
    %189 = vmatpush1.msra.mxu0 0.0
    %190 = vmatprep.subr.mxu0 0.0
    %191 = vmatpush1.msra.mxu0 0.0
    %192 = vmatprep.subr.mxu0 0.0
    %193 = vmatpush1.msra.mxu0 0.0
    %194 = vmatprep.subr.mxu0 0.0
    %195 = vmatpush1.msra.mxu0 0.0
    %196 = vmatprep.subr.mxu0 0.0
    %197 = vmatpush1.msra.mxu0 0.0
    %198 = vmatprep.mubr.f32.mxu0 0.0
    %199 = vmatmul.mubr.f32.gmra.mrb[0].mxu0 %v107
    %v200 = vpop.f32.mrb[0].mxu0
    %v201 = vadd.f32 %v132, %v200
    %v202 = vpop.f32.mrb[0].mxu0
    %203 = vdwg.mxu0
    %204 = vst [vmem:[#allocation4] sm:$0xff] %v201
    // Predicated region
    $region22: #{studnet_forward.1} parent=1 // pred_check
      _
    $region23: #{studnet_forward.1} parent=1 // pred_check_branch
      %206 = sbr.rel (0) target = $region25
    $region24: #{studnet_forward.1} parent=1 // pred_region
      %s208 = ssub.s32 128, 128
      %209 = vsyncadd [#allocation3], %s208
      %s211 = sshll.u32 [#allocation2], 4
      %s212 = int_to_ptr.vmem [resolvable:$true] %s211
      %214 = dma.vmem_to_hbm [thread:$0]  %s212, 128, %s5, [#allocation3]
    $region25: #{studnet_forward.1} parent=1 // pred_fallthru
      _
    // Predicated region
    $region26: #{studnet_forward.1} parent=1 // pred_check
      _
    $region27: #{studnet_forward.1} parent=1 // pred_check_branch
      %216 = sbr.rel (0) target = $region29
    $region28: #{studnet_forward.1} parent=1 // pred_region
      %s218 = ssub.s32 128, 128
      %219 = vsyncadd [#allocation5], %s218
      %s221 = sshll.u32 [#allocation4], 4
      %s222 = int_to_ptr.vmem [resolvable:$true] %s221
      %224 = dma.vmem_to_hbm [thread:$0]  %s222, 128, %s6, [#allocation5]
    $region29: #{studnet_forward.1} parent=1 // pred_fallthru
      _
    // Predicated region
    $region30: #{studnet_forward.1} parent=1 // pred_check
      _
    $region31: #{studnet_forward.1} parent=1 // pred_check_branch
      %226 = sbr.rel (0) target = $region33
    $region32: #{studnet_forward.1} parent=1 // pred_region
      %227 = dma.done [#allocation3], 128
    $region33: #{studnet_forward.1} parent=1 // pred_fallthru
      _
    // Predicated region
    $region34: #{studnet_forward.1} parent=1 // pred_check
      _
    $region35: #{studnet_forward.1} parent=1 // pred_check_branch
      %229 = sbr.rel (0) target = $region37
    $region36: #{studnet_forward.1} parent=1 // pred_region
      %230 = dma.done [#allocation5], 128
    $region37: #{studnet_forward.1} parent=1 // pred_fallthru
      _
    %231 = vsyncpa [#allocation3], 1
    %232 = vsyncpa [#allocation5], 1

</llo_original>
